<compile_context>
chip_gen: v6e
topology: v6e:2x2x1
jax: 0.10.0
libtpu: 0.0.40
codegen_flags: <defaults>
</compile_context>

<pallas_src>
import functools

import jax
import jax.numpy as jnp
from jax.experimental import pallas as pl
from jax.experimental.pallas import tpu as pltpu

EPS = 1e-5  # torch.nn.InstanceNorm2d default


def _maxout2d_kernel(x_ref, w_ref, b_ref, g_ref, beta_ref, o_ref, *, pool, cout):
    # x_ref:    (Bt, Cin, HW)        batch block, channels on sublanes, HW on lanes
    # w_ref:    (pool*Cout, Cin)     conv weight, rows pool-major (row = p*Cout + c)
    # b_ref:    (pool*Cout, 1)       conv bias, pool-major
    # g_ref:    (Cout, 1)            InstanceNorm gamma
    # beta_ref: (Cout, 1)            InstanceNorm beta
    # o_ref:    (Bt, Cout, HW)
    hw = x_ref.shape[-1]
    inv_hw = 1.0 / hw

    w = w_ref[...]          # (pool*Cout, Cin)
    bias = b_ref[...]       # (pool*Cout, 1)  -> broadcasts along lanes
    g = g_ref[...]          # (Cout, 1)
    bb = beta_ref[...]      # (Cout, 1)

    # Static unroll over the (small) per-step batch block.
    for b in range(x_ref.shape[0]):
        # Single fused matmul covering all pool slots: (pool*Cout, HW).
        z = jnp.dot(w, x_ref[b], preferred_element_type=jnp.float32) + bias

        # Maxout over pool-major contiguous row groups.
        y = z[:cout, :]
        for p in range(1, pool):
            y = jnp.maximum(y, z[p * cout:(p + 1) * cout, :])   # (Cout, HW)

        # InstanceNorm2d: per-channel stats over the spatial (lane) axis,
        # one-pass (mean and E[y^2]), biased variance, eps inside rsqrt.
        mean = jnp.sum(y, axis=1, keepdims=True) * inv_hw        # (Cout, 1)
        ex2 = jnp.sum(y * y, axis=1, keepdims=True) * inv_hw     # (Cout, 1)
        var = ex2 - mean * mean
        o_ref[b] = ((y - mean) * jax.lax.rsqrt(var + EPS)) * g + bb


def _pick_block_n(n):
    """Samples per grid step: keep the grid >= 2 (both v7x TCs busy) when possible."""
    if n < 2:
        return max(n, 1)
    cap = min(8, n // 2)
    for bt in range(cap, 0, -1):
        if n % bt == 0:
            return bt
    return 1


def maxout2d(x_nchw, w_conv, b_conv, gamma, beta, pool):
    """x_nchw: (N, Cin, H, W); w_conv: (Cout*pool, Cin, 1, 1); b_conv: (Cout*pool,)."""
    N, Cin, H, W = x_nchw.shape
    Cfull = w_conv.shape[0]
    Cout = Cfull // pool
    HW = H * W

    # Glue (plain JAX, no HBM transposes): NCHW is already (C, H*W) per sample.
    x = x_nchw.reshape(N, Cin, HW).astype(jnp.float32)
    # Regroup conv rows pool-major: new row r = p*Cout + c holds original row
    # c*pool + p (matches torch's .view(N, Cout, pool, H, W) channel split).
    w_r = (jnp.transpose(w_conv[:, :, 0, 0].reshape(Cout, pool, Cin), (1, 0, 2))
           .reshape(pool * Cout, Cin).astype(jnp.float32))
    b_r = (jnp.transpose(b_conv.reshape(Cout, pool), (1, 0))
           .reshape(pool * Cout, 1).astype(jnp.float32))
    g_r = gamma.reshape(Cout, 1).astype(jnp.float32)
    beta_r = beta.reshape(Cout, 1).astype(jnp.float32)

    bt = _pick_block_n(N)
    grid = (N // bt,)

    # Rough per-step VMEM budget (double-buffered in/out + live z intermediate),
    # with headroom; never below the default scoped limit.
    # NOTE: for very large H*W the sample itself should be tiled over HW with a
    # two-pass InstanceNorm (sum / sum-of-squares accumulation); not needed here.
    block_bytes = 4 * (2 * bt * HW * (Cin + Cout)
                       + bt * pool * Cout * HW
                       + 2 * pool * Cout * (Cin + 1)
                       + 4 * Cout)
    vmem_limit = int(min(128 * 1024 * 1024, max(32 * 1024 * 1024, 2 * block_bytes)))

    out = pl.pallas_call(
        functools.partial(_maxout2d_kernel, pool=pool, cout=Cout),
        out_shape=jax.ShapeDtypeStruct((N, Cout, HW), jnp.float32),
        grid_spec=pltpu.PrefetchScalarGridSpec(
            num_scalar_prefetch=0,
            grid=grid,
            in_specs=[
                pl.BlockSpec((bt, Cin, HW), lambda n: (n, 0, 0)),
                pl.BlockSpec((pool * Cout, Cin), lambda n: (0, 0)),
                pl.BlockSpec((pool * Cout, 1), lambda n: (0, 0)),
                pl.BlockSpec((Cout, 1), lambda n: (0, 0)),
                pl.BlockSpec((Cout, 1), lambda n: (0, 0)),
            ],
            out_specs=pl.BlockSpec((bt, Cout, HW), lambda n: (n, 0, 0)),
        ),
        compiler_params=pltpu.CompilerParams(
            dimension_semantics=("parallel",),
            vmem_limit_bytes=vmem_limit,
        ),
    )(x, w_r, b_r, g_r, beta_r)

    # Reshape only (free): (N, Cout, HW) -> (N, Cout, H, W).
    return out.reshape(N, Cout, H, W)


def maxout2d_ref(x, w_conv, b_conv, gamma, beta, pool):
    """Pure-JAX reference mirroring the PyTorch forward (NCHW)."""
    N, Cin, H, W = x.shape
    Cout = w_conv.shape[0] // pool
    y = jnp.einsum("nchw,oc->nohw", x, w_conv[:, :, 0, 0]) + b_conv[None, :, None, None]
    y = y.reshape(N, Cout, pool, H, W).max(axis=2)
    mean = y.mean(axis=(2, 3), keepdims=True)
    var = ((y - mean) ** 2).mean(axis=(2, 3), keepdims=True)
    y = (y - mean) / jnp.sqrt(var + EPS)
    return y * gamma[None, :, None, None] + beta[None, :, None, None]


if __name__ == "__main__":
    # Small shapes consistent with the module: N=2, Cin=4, Cout=4, pool=2, H=W=16.
    N, Cin, Cout, pool, H, W = 2, 4, 4, 2, 16, 16
    key = jax.random.PRNGKey(0)
    kx, kw, kb, kg, kbeta = jax.random.split(key, 5)

    x = jax.random.normal(kx, (N, Cin, H, W), dtype=jnp.float32)

    # Deterministic parameter init mimicking the module's __init__ (block=0):
    # xavier_uniform_(lin.weight, gain=1.0) for a (Cout*pool, Cin, 1, 1) conv weight.
    fan_in, fan_out = Cin, Cout * pool
    bound_w = (6.0 / (fan_in + fan_out)) ** 0.5
    w_conv = jax.random.uniform(kw, (Cout * pool, Cin, 1, 1), jnp.float32, -bound_w, bound_w)
    bound_b = 1.0 / (fan_in ** 0.5)  # torch Conv2d default bias init
    b_conv = jax.random.uniform(kb, (Cout * pool,), jnp.float32, -bound_b, bound_b)
    # InstanceNorm2d affine params (torch default is ones/zeros; perturb deterministically).
    gamma = 1.0 + 0.1 * jax.random.normal(kg, (Cout,), dtype=jnp.float32)
    beta = 0.1 * jax.random.normal(kbeta, (Cout,), dtype=jnp.float32)

    out = maxout2d(x, w_conv, b_conv, gamma, beta, pool)
    out = jax.block_until_ready(out)

    ref = maxout2d_ref(x, w_conv, b_conv, gamma, beta, pool)
    assert out.shape == (N, Cout, H, W)
    assert jnp.allclose(out, ref, atol=1e-4, rtol=1e-4), float(jnp.max(jnp.abs(out - ref)))
    print("KERNEL_OK")
</pallas_src>

<mosaic_0001>
module attributes {stable_mosaic.version = 11 : i64} {
  func.func @_maxout2d_kernel(%arg0: i32, %arg1: memref<1x4x256xf32, #tpu.memory_space<vmem>>, %arg2: memref<8x4xf32, #tpu.memory_space<vmem>>, %arg3: memref<8x1xf32, #tpu.memory_space<vmem>>, %arg4: memref<4x1xf32, #tpu.memory_space<vmem>>, %arg5: memref<4x1xf32, #tpu.memory_space<vmem>>, %arg6: memref<1x4x256xf32, #tpu.memory_space<vmem>>) attributes {dimension_semantics = [#tpu.dimension_semantics<parallel>], iteration_bounds = array<i64: 2>, scalar_prefetch = 0 : i64, scratch_operands = 0 : i64, tpu.core_type = #tpu.core_type<tc>, window_params = [{transform_indices = @transform_0, window_bounds = array<i64: 1, 4, 256>}, {pipeline_mode = #tpu.pipeline_mode<synchronous>, transform_indices = @transform_1, window_bounds = array<i64: 8, 4>}, {pipeline_mode = #tpu.pipeline_mode<synchronous>, transform_indices = @transform_2, window_bounds = array<i64: 8, 1>}, {pipeline_mode = #tpu.pipeline_mode<synchronous>, transform_indices = @transform_3, window_bounds = array<i64: 4, 1>}, {pipeline_mode = #tpu.pipeline_mode<synchronous>, transform_indices = @transform_4, window_bounds = array<i64: 4, 1>}, {transform_indices = @transform_5, window_bounds = array<i64: 1, 4, 256>}]} {
    %c0 = arith.constant 0 : index
    %c0_0 = arith.constant 0 : index
    %0 = vector.load %arg2[%c0, %c0_0] : memref<8x4xf32, #tpu.memory_space<vmem>>, vector<8x4xf32>
    %c0_1 = arith.constant 0 : index
    %c0_2 = arith.constant 0 : index
    %1 = vector.load %arg3[%c0_1, %c0_2] : memref<8x1xf32, #tpu.memory_space<vmem>>, vector<8x1xf32>
    %c0_3 = arith.constant 0 : index
    %c0_4 = arith.constant 0 : index
    %2 = vector.load %arg4[%c0_3, %c0_4] : memref<4x1xf32, #tpu.memory_space<vmem>>, vector<4x1xf32>
    %c0_5 = arith.constant 0 : index
    %c0_6 = arith.constant 0 : index
    %3 = vector.load %arg5[%c0_5, %c0_6] : memref<4x1xf32, #tpu.memory_space<vmem>>, vector<4x1xf32>
    %c0_7 = arith.constant 0 : index
    %c0_8 = arith.constant 0 : index
    %c0_9 = arith.constant 0 : index
    %4 = vector.load %arg1[%c0_7, %c0_8, %c0_9] : memref<1x4x256xf32, #tpu.memory_space<vmem>>, vector<1x4x256xf32>
    %5 = vector.shape_cast %4 : vector<1x4x256xf32> to vector<4x256xf32>
    %cst = arith.constant dense<0.000000e+00> : vector<8x256xf32>
    %6 = tpu.matmul %0, %5, %cst {dimension_numbers = #tpu.dot_dimension_numbers<[1], [0], [0], [1], [0, 0, 1, 1], [], []>} : vector<8x4xf32>, vector<4x256xf32>, vector<8x256xf32> -> vector<8x256xf32>
    %7 = vector.broadcast %1 : vector<8x1xf32> to vector<8x256xf32>
    %8 = arith.addf %6, %7 : vector<8x256xf32>
    %9 = vector.extract_strided_slice %8 {offsets = [0, 0], sizes = [4, 256], strides = [1, 1]} : vector<8x256xf32> to vector<4x256xf32>
    %10 = vector.extract_strided_slice %8 {offsets = [4, 0], sizes = [4, 256], strides = [1, 1]} : vector<8x256xf32> to vector<4x256xf32>
    %11 = arith.maximumf %9, %10 : vector<4x256xf32>
    %cst_10 = arith.constant dense<0.000000e+00> : vector<4xf32>
    %12 = vector.multi_reduction <add>, %11, %cst_10 [1] : vector<4x256xf32> to vector<4xf32>
    %13 = vector.shape_cast %12 : vector<4xf32> to vector<4x1xf32>
    %cst_11 = arith.constant 3.906250e-03 : f32
    %14 = vector.broadcast %cst_11 : f32 to vector<4x1xf32>
    %15 = arith.mulf %13, %14 : vector<4x1xf32>
    %16 = arith.mulf %11, %11 : vector<4x256xf32>
    %cst_12 = arith.constant dense<0.000000e+00> : vector<4xf32>
    %17 = vector.multi_reduction <add>, %16, %cst_12 [1] : vector<4x256xf32> to vector<4xf32>
    %18 = vector.shape_cast %17 : vector<4xf32> to vector<4x1xf32>
    %cst_13 = arith.constant 3.906250e-03 : f32
    %19 = vector.broadcast %cst_13 : f32 to vector<4x1xf32>
    %20 = arith.mulf %18, %19 : vector<4x1xf32>
    %21 = arith.mulf %15, %15 : vector<4x1xf32>
    %22 = arith.subf %20, %21 : vector<4x1xf32>
    %23 = vector.broadcast %15 : vector<4x1xf32> to vector<4x256xf32>
    %24 = arith.subf %11, %23 : vector<4x256xf32>
    %cst_14 = arith.constant 9.99999974E-6 : f32
    %25 = vector.broadcast %cst_14 : f32 to vector<4x1xf32>
    %26 = arith.addf %22, %25 : vector<4x1xf32>
    %27 = math.rsqrt %26 : vector<4x1xf32>
    %28 = vector.broadcast %27 : vector<4x1xf32> to vector<4x256xf32>
    %29 = arith.mulf %24, %28 : vector<4x256xf32>
    %30 = vector.broadcast %2 : vector<4x1xf32> to vector<4x256xf32>
    %31 = arith.mulf %29, %30 : vector<4x256xf32>
    %32 = vector.broadcast %3 : vector<4x1xf32> to vector<4x256xf32>
    %33 = arith.addf %31, %32 : vector<4x256xf32>
    %c0_15 = arith.constant 0 : index
    %c0_16 = arith.constant 0 : index
    %c0_17 = arith.constant 0 : index
    %34 = vector.load %arg6[%c0_15, %c0_16, %c0_17] : memref<1x4x256xf32, #tpu.memory_space<vmem>>, vector<1x4x256xf32>
    %35 = vector.shape_cast %34 : vector<1x4x256xf32> to vector<4x256xf32>
    %36 = vector.shape_cast %33 : vector<4x256xf32> to vector<1x4x256xf32>
    tpu.vector_store %arg6[%c0_15, %c0_16, %c0_17], %36 {strides = array<i32>} : memref<1x4x256xf32, #tpu.memory_space<vmem>>, vector<1x4x256xf32>,
    return
  }
  func.func @transform_0(%arg0: i32) -> (i32, i32, i32) {
    %c0_i32 = arith.constant 0 : i32
    %c0_i32_0 = arith.constant 0 : i32
    %c0_i32_1 = arith.constant 0 : i32
    return %arg0, %c0_i32, %c0_i32_0 : i32, i32, i32
  }
  func.func @transform_1(%arg0: i32) -> (i32, i32) {
    %c0_i32 = arith.constant 0 : i32
    %c0_i32_0 = arith.constant 0 : i32
    %c0_i32_1 = arith.constant 0 : i32
    return %c0_i32, %c0_i32_0 : i32, i32
  }
  func.func @transform_2(%arg0: i32) -> (i32, i32) {
    %c0_i32 = arith.constant 0 : i32
    %c0_i32_0 = arith.constant 0 : i32
    %c0_i32_1 = arith.constant 0 : i32
    return %c0_i32, %c0_i32_0 : i32, i32
  }
  func.func @transform_3(%arg0: i32) -> (i32, i32) {
    %c0_i32 = arith.constant 0 : i32
    %c0_i32_0 = arith.constant 0 : i32
    %c0_i32_1 = arith.constant 0 : i32
    return %c0_i32, %c0_i32_0 : i32, i32
  }
  func.func @transform_4(%arg0: i32) -> (i32, i32) {
    %c0_i32 = arith.constant 0 : i32
    %c0_i32_0 = arith.constant 0 : i32
    %c0_i32_1 = arith.constant 0 : i32
    return %c0_i32, %c0_i32_0 : i32, i32
  }
  func.func @transform_5(%arg0: i32) -> (i32, i32, i32) {
    %c0_i32 = arith.constant 0 : i32
    %c0_i32_0 = arith.constant 0 : i32
    %c0_i32_1 = arith.constant 0 : i32
    return %arg0, %c0_i32, %c0_i32_0 : i32, i32, i32
  }
}

</mosaic_0001>

<llo_original>
// kernel: tpu_custom_call.1
$region0: #{tpu_custom_call.1}
  #allocation0 [shape = 'u32[]', space=smem, size = 0x4, offset = 0x4, fixed_abs, tag = 'smem constant byte address 0x4 - core index']
  #allocation1 [shape = 'u32[144,128]{1,0:T(1,128)}', space=vmem, size = 0x12000, scoped, tag = 'internal scratch']
  %s0 = inlined_call_operand.vmem [shape: f32[2,4,256], index: 0, kind: input, shape index: {}]
  %s1 = inlined_call_operand.vmem [shape: f32[8,4], index: 1, kind: input, shape index: {}]
  %s2 = inlined_call_operand.vmem [shape: f32[8,1], index: 2, kind: input, shape index: {}]
  %s3 = inlined_call_operand.vmem [shape: f32[4,1], index: 3, kind: input, shape index: {}]
  %s4 = inlined_call_operand.vmem [shape: f32[4,1], index: 4, kind: input, shape index: {}]
  %s5 = inlined_call_operand.hbm [shape: f32[2,4,256], index: 5, kind: output, shape index: {}]
  %s6 = sld [smem:[#allocation0]]
  $region53: #{tpu_custom_call.1} parent=0
    _
  %s8 = ssub.s32 1, %s6
  %s9 = scalar_select 0, %s8, %s6
  $region1: #{tpu_custom_call.1} parent=0
    #allocation2 [shape = 'u8[8192]{0}', space=vmem, size = 0x2000, scoped, tag = 'output window, operand 0']
    #allocation3 [shape = 's32[2]{0}', space=sflag, size = 0x8, scoped, tag = 'scoped memory for tpu_custom_call.1']
    %10 = vsyncpa [#allocation3], 0
    %s11 = scalar_lea.sflag [#allocation3], 1
    %12 = vsyncpa %s11, 0
    loop: start=0, step=1, limit=4
    $region2: #{tpu_custom_call.1} parent=1 // loop_pre_header
      _
    $region3: #{tpu_custom_call.1} parent=1 // loop_header
      %s14 = sphi 0, %s18
      %p15 = scmp.ge.s32.totalorder %s14, 4
      %s24 = sphi 0, %s26
      %s27 = sphi 0, %s24
      %s28 = sphi 0, %s27
      %s44 = sphi 0, %s28
      %s48 = sphi 0, %s48
      %s50 = sphi 0, %s48
      %s51 = sphi 0, %s50
      %s65 = sphi 0, %s51
      %s69 = sphi 0, %s69
      %s71 = sphi 0, %s69
      %s72 = sphi 0, %s71
      %s86 = sphi 0, %s72
      %s90 = sphi 0, %s90
      %s92 = sphi 0, %s90
      %s93 = sphi 0, %s92
      %s107 = sphi 0, %s93
      %s111 = sphi 0, %s111
      %s113 = sphi 0, %s111
      %s114 = sphi 0, %s113
      %s128 = sphi 0, %s114
      %s134 = sphi 0, %s136
      %s137 = sphi 0, %s134
      %s138 = sphi 0, %s137
      %s154 = sphi 0, %s138
    $region4: #{tpu_custom_call.1} parent=1 // loop_header_branch
      %17 = sbr.rel (%p15) target = $region8
    $region5: #{tpu_custom_call.1} parent=1 // loop_body
      %s19 = ssub.s32 %s14, 1
      %s20 = ssub.s32 %s14, 2
      %s21 = sadd.s32 %s14, 1
      %s22 = ssub.s32 %s14, %s21
      %p23 = scmp.eq.s32.totalorder %s22, 0
      %s25 = sadd.s32 %s24, 1
      %s26 = scalar_select %p23, %s24, %s25
      %p29 = pneg %p23
      %p30 = scmp.eq.s32.totalorder %s14, 1
      %p31 = por %p29, %p30
      %p32 = scmp.ne.s32.totalorder %s24, %s27
      %p33 = scmp.eq.s32.totalorder %s14, 0
      %p34 = por %p32, %p33
      %p35 = scmp.ne.s32.totalorder %s24, %s27
      %p36 = scmp.eq.s32.totalorder %s19, 1
      %p37 = por %p35, %p36
      %p38 = scmp.ne.s32.totalorder %s27, %s28
      %p39 = scmp.eq.s32.totalorder %s19, 0
      %p40 = por %p38, %p39
      %p41 = scmp.ne.s32.totalorder %s27, %s28
      %p42 = scmp.eq.s32.totalorder %s20, 1
      %p43 = por %p41, %p42
      %p45 = scmp.ne.s32.totalorder %s28, %s44
      %p46 = scmp.eq.s32.totalorder %s20, 0
      %p47 = por %p45, %p46
      %s49 = sadd.s32 %s48, 1
      %p52 = scmp.eq.s32.totalorder %s14, 1
      %p53 = scmp.ne.s32.totalorder %s48, %s50
      %p54 = scmp.eq.s32.totalorder %s14, 0
      %p55 = por %p53, %p54
      %p56 = scmp.ne.s32.totalorder %s48, %s50
      %p57 = scmp.eq.s32.totalorder %s19, 1
      %p58 = por %p56, %p57
      %p59 = scmp.ne.s32.totalorder %s50, %s51
      %p60 = scmp.eq.s32.totalorder %s19, 0
      %p61 = por %p59, %p60
      %p62 = scmp.ne.s32.totalorder %s50, %s51
      %p63 = scmp.eq.s32.totalorder %s20, 1
      %p64 = por %p62, %p63
      %p66 = scmp.ne.s32.totalorder %s51, %s65
      %p67 = scmp.eq.s32.totalorder %s20, 0
      %p68 = por %p66, %p67
      %s70 = sadd.s32 %s69, 1
      %p73 = scmp.eq.s32.totalorder %s14, 1
      %p74 = scmp.ne.s32.totalorder %s69, %s71
      %p75 = scmp.eq.s32.totalorder %s14, 0
      %p76 = por %p74, %p75
      %p77 = scmp.ne.s32.totalorder %s69, %s71
      %p78 = scmp.eq.s32.totalorder %s19, 1
      %p79 = por %p77, %p78
      %p80 = scmp.ne.s32.totalorder %s71, %s72
      %p81 = scmp.eq.s32.totalorder %s19, 0
      %p82 = por %p80, %p81
      %p83 = scmp.ne.s32.totalorder %s71, %s72
      %p84 = scmp.eq.s32.totalorder %s20, 1
      %p85 = por %p83, %p84
      %p87 = scmp.ne.s32.totalorder %s72, %s86
      %p88 = scmp.eq.s32.totalorder %s20, 0
      %p89 = por %p87, %p88
      %s91 = sadd.s32 %s90, 1
      %p94 = scmp.eq.s32.totalorder %s14, 1
      %p95 = scmp.ne.s32.totalorder %s90, %s92
      %p96 = scmp.eq.s32.totalorder %s14, 0
      %p97 = por %p95, %p96
      %p98 = scmp.ne.s32.totalorder %s90, %s92
      %p99 = scmp.eq.s32.totalorder %s19, 1
      %p100 = por %p98, %p99
      %p101 = scmp.ne.s32.totalorder %s92, %s93
      %p102 = scmp.eq.s32.totalorder %s19, 0
      %p103 = por %p101, %p102
      %p104 = scmp.ne.s32.totalorder %s92, %s93
      %p105 = scmp.eq.s32.totalorder %s20, 1
      %p106 = por %p104, %p105
      %p108 = scmp.ne.s32.totalorder %s93, %s107
      %p109 = scmp.eq.s32.totalorder %s20, 0
      %p110 = por %p108, %p109
      %s112 = sadd.s32 %s111, 1
      %p115 = scmp.eq.s32.totalorder %s14, 1
      %p116 = scmp.ne.s32.totalorder %s111, %s113
      %p117 = scmp.eq.s32.totalorder %s14, 0
      %p118 = por %p116, %p117
      %p119 = scmp.ne.s32.totalorder %s111, %s113
      %p120 = scmp.eq.s32.totalorder %s19, 1
      %p121 = por %p119, %p120
      %p122 = scmp.ne.s32.totalorder %s113, %s114
      %p123 = scmp.eq.s32.totalorder %s19, 0
      %p124 = por %p122, %p123
      %p125 = scmp.ne.s32.totalorder %s113, %s114
      %p126 = scmp.eq.s32.totalorder %s20, 1
      %p127 = por %p125, %p126
      %p129 = scmp.ne.s32.totalorder %s114, %s128
      %p130 = scmp.eq.s32.totalorder %s20, 0
      %p131 = por %p129, %p130
      %s132 = ssub.s32 %s14, %s21
      %p133 = scmp.eq.s32.totalorder %s132, 0
      %s135 = sadd.s32 %s134, 1
      %s136 = scalar_select %p133, %s134, %s135
      %p139 = pneg %p133
      %p140 = scmp.eq.s32.totalorder %s14, 1
      %p141 = por %p139, %p140
      %p142 = scmp.ne.s32.totalorder %s134, %s137
      %p143 = scmp.eq.s32.totalorder %s14, 0
      %p144 = por %p142, %p143
      %p145 = scmp.ne.s32.totalorder %s134, %s137
      %p146 = scmp.eq.s32.totalorder %s19, 1
      %p147 = por %p145, %p146
      %p148 = scmp.ne.s32.totalorder %s137, %s138
      %p149 = scmp.eq.s32.totalorder %s19, 0
      %p150 = por %p148, %p149
      %p151 = scmp.ne.s32.totalorder %s137, %s138
      %p152 = scmp.eq.s32.totalorder %s20, 1
      %p153 = por %p151, %p152
      %p155 = scmp.ne.s32.totalorder %s138, %s154
      %p156 = scmp.eq.s32.totalorder %s20, 0
      %p157 = por %p155, %p156
      %p158 = scmp.le.s32.totalorder 1, %s14
      %p159 = scmp.lt.s32.totalorder %s14, 3
      %p160 = pnand %p158, %p159
      %p161 = pneg %p160
      // Predicated region
      $region9: #{tpu_custom_call.1} parent=5 // pred_check
        _
      $region10: #{tpu_custom_call.1} parent=5 // pred_check_branch
        %163 = sbr.rel (%p160) target = $region12
      $region11: #{tpu_custom_call.1} parent=5 // pred_region
        %s164 = ssub.s32 %s14, 1
        // Predicated region
        $region13: #{tpu_custom_call.1} parent=11 // pred_check
          %p165 = pneg %p61
        $region14: #{tpu_custom_call.1} parent=11 // pred_check_branch
          %167 = sbr.rel (%p165) target = $region16
        $region15: #{tpu_custom_call.1} parent=11 // pred_region
          _
        $region16: #{tpu_custom_call.1} parent=11 // pred_fallthru
          _
        // Predicated region
        $region17: #{tpu_custom_call.1} parent=11 // pred_check
          %p168 = pneg %p82
        $region18: #{tpu_custom_call.1} parent=11 // pred_check_branch
          %170 = sbr.rel (%p168) target = $region20
        $region19: #{tpu_custom_call.1} parent=11 // pred_region
          _
        $region20: #{tpu_custom_call.1} parent=11 // pred_fallthru
          _
        // Predicated region
        $region21: #{tpu_custom_call.1} parent=11 // pred_check
          %p171 = pneg %p103
        $region22: #{tpu_custom_call.1} parent=11 // pred_check_branch
          %173 = sbr.rel (%p171) target = $region24
        $region23: #{tpu_custom_call.1} parent=11 // pred_region
          _
        $region24: #{tpu_custom_call.1} parent=11 // pred_fallthru
          _
        // Predicated region
        $region25: #{tpu_custom_call.1} parent=11 // pred_check
          %p174 = pneg %p124
        $region26: #{tpu_custom_call.1} parent=11 // pred_check_branch
          %176 = sbr.rel (%p174) target = $region28
        $region27: #{tpu_custom_call.1} parent=11 // pred_region
          _
        $region28: #{tpu_custom_call.1} parent=11 // pred_fallthru
          _
      $region12: #{tpu_custom_call.1} parent=5 // pred_fallthru
        _
      %p177 = scmp.lt.s32.totalorder %s14, 2
      // Predicated region
      $region29: #{tpu_custom_call.1} parent=5 // pred_check
        %p178 = pneg %p177
      $region30: #{tpu_custom_call.1} parent=5 // pred_check_branch
        %180 = sbr.rel (%p178) target = $region32
      $region31: #{tpu_custom_call.1} parent=5 // pred_region
        // Predicated region
        $region33: #{tpu_custom_call.1} parent=31 // pred_check
          %p181 = pneg %p34
        $region34: #{tpu_custom_call.1} parent=31 // pred_check_branch
          %183 = sbr.rel (%p181) target = $region36
        $region35: #{tpu_custom_call.1} parent=31 // pred_region
          %p184 = scmp.lt.s32.totalorder %s14, 1
          %s185 = scalar_select %p184, %s14, 1
          %s186 = smul.addr %s185, 2
          %s187 = smul.addr %s186, 4
          %s188 = scalar_lea.vmem %s0, %s187
        $region36: #{tpu_custom_call.1} parent=31 // pred_fallthru
          _
      $region32: #{tpu_custom_call.1} parent=5 // pred_fallthru
        _
      %p189 = scmp.le.s32.totalorder 1, %s14
      %p190 = scmp.lt.s32.totalorder %s14, 3
      %p191 = pnand %p189, %p190
      %p192 = pneg %p191
      // Predicated region
      $region37: #{tpu_custom_call.1} parent=5 // pred_check
        _
      $region38: #{tpu_custom_call.1} parent=5 // pred_check_branch
        %194 = sbr.rel (%p191) target = $region40
      $region39: #{tpu_custom_call.1} parent=5 // pred_region
        %s195 = ssub.s32 %s14, 1
        %p196 = scmp.lt.s32.totalorder %s19, 1
        %s197 = scalar_select %p196, %s19, 1
        %s198 = smul.addr %s197, 2
        %s199 = smul.addr %s198, 4
        %s200 = scalar_lea.vmem %s0, %s199
        %p201 = pneg %p40
        %p202 = pneg %p37
        %p203 = pneg %p61
        %p204 = pneg %p58
        %p205 = pneg %p82
        %p206 = pneg %p79
        %p207 = pneg %p103
        %p208 = pneg %p100
        %p209 = pneg %p124
        %p210 = pneg %p121
        %p211 = pneg %p150
        %p212 = pneg %p147
        %s213 = sand.u32 %s137, 1
        %s214 = scalar_lea.sflag [#allocation3], %s213
        %s215 = sand.u32 %s137, 1
        %s216 = smul.addr %s215, 8
        %s217 = scalar_lea.vmem [#allocation2], %s216
        %p218 = scmp.lt.s32.totalorder %s19, 1
        %s219 = scalar_select %p218, %s19, 1
        %s220 = smul.addr %s219, 2
        %s221 = smul.addr %s220, 4
        %s222 = scalar_lea.vmem %s0, %s221
        %v223 = vld [vmem:[%s1] sm:$0xff]
        %v224 = vld [vmem:[%s2] sm:$0xff]
        %v225 = vld [vmem:[%s3] sm:$0xf]
        %v226 = vld [vmem:[%s4] sm:$0xf]
        %v227 = vld [vmem:[%s222] sm:$0xff]
        %229 = vset.pattern.permute.xlu0 0
        %230 = vperm.xlu0 %229, %v224
        %v231 = vpop.permute.xlu0 %230
        %v234 = vcombine.high %v227, %v227
        %vm235 = vcmask 31744
        %v237 = vsel %vm235, %v223, 0
        %vm239 = vcmask 1043456
        %v240 = vsel %vm239, %v227, 0
        %v242 = vsel %vm239, %v234, 0
        %244 = vmatprep.subr.mxu0 0.0
        %245 = vmatpush1.msra.mxu0 0.0
        %246 = vmatprep.subr.mxu0 0.0
        %247 = vmatpush1.msra.mxu0 0.0
        %248 = vmatprep.subr.mxu0 0.0
        %249 = vmatpush1.msra.mxu0 0.0
        %250 = vmatprep.subr.mxu0 0.0
        %251 = vmatpush1.msra.mxu0 0.0
        %252 = vmatprep.subr.mxu0 0.0
        %253 = vmatpush1.msra.mxu0 0.0
        %254 = vmatprep.subr.mxu0 0.0
        %255 = vmatpush1.msra.mxu0 0.0
        %256 = vmatprep.subr.mxu0 0.0
        %257 = vmatpush1.msra.mxu0 0.0
        %258 = vmatprep.subr.mxu0 0.0
        %259 = vmatpush1.msra.mxu0 0.0
        %260 = vmatprep.subr.mxu0 0.0
        %261 = vmatpush1.msra.mxu0 0.0
        %262 = vmatprep.subr.mxu0 0.0
        %263 = vmatpush1.msra.mxu0 0.0
        %264 = vmatprep.subr.mxu0 0.0
        %265 = vmatpush1.msra.mxu0 0.0
        %266 = vmatprep.subr.mxu0 0.0
        %267 = vmatpush1.msra.mxu0 0.0
        %268 = vmatprep.subr.mxu0 0.0
        %269 = vmatpush1.msra.mxu0 0.0
        %270 = vmatprep.subr.mxu0 0.0
        %271 = vmatpush1.msra.mxu0 0.0
        %272 = vmatprep.subr.mxu0 0.0
        %273 = vmatpush1.msra.mxu0 0.0
        %274 = vmatprep.subr.mxu0 %v242
        %275 = vmatpush1.msra.mxu0 %v240
        %276 = vmatprep.subr.mxu0 0.0
        %277 = vmatpush2.msra.mxu0 0.0
        %278 = vmatprep.subr.mxu0 0.0
        %279 = vmatpush2.msra.mxu0 0.0
        %280 = vmatprep.subr.mxu0 0.0
        %281 = vmatpush2.msra.mxu0 0.0
        %282 = vmatprep.subr.mxu0 0.0
        %283 = vmatpush2.msra.mxu0 0.0
        %284 = vmatprep.subr.mxu0 0.0
        %285 = vmatpush2.msra.mxu0 0.0
        %286 = vmatprep.subr.mxu0 0.0
        %287 = vmatpush2.msra.mxu0 0.0
        %288 = vmatprep.subr.mxu0 0.0
        %289 = vmatpush2.msra.mxu0 0.0
        %290 = vmatprep.subr.mxu0 0.0
        %291 = vmatpush2.msra.mxu0 0.0
        %292 = vmatprep.subr.mxu0 0.0
        %293 = vmatpush2.msra.mxu0 0.0
        %294 = vmatprep.subr.mxu0 0.0
        %295 = vmatpush2.msra.mxu0 0.0
        %296 = vmatprep.subr.mxu0 0.0
        %297 = vmatpush2.msra.mxu0 0.0
        %298 = vmatprep.subr.mxu0 0.0
        %299 = vmatpush2.msra.mxu0 0.0
        %300 = vmatprep.subr.mxu0 0.0
        %301 = vmatpush2.msra.mxu0 0.0
        %302 = vmatprep.subr.mxu0 0.0
        %303 = vmatpush2.msra.mxu0 0.0
        %304 = vmatprep.subr.mxu0 0.0
        %305 = vmatpush2.msra.mxu0 0.0
        %306 = vmatprep.subr.mxu0 0.0
        %307 = vmatpush2.msra.mxu0 0.0
        %308 = vmatprep.mubr.f32.mxu0 0.0
        %309 = vmatmul.mubr.f32.gmra.mxu0 %v237
        %v310 = vpop.f32.mrf.mxu0
        %v311 = vadd.f32 %v231, %v310
        %v312 = vpop.f32.mrf.mxu0
        %v313 = vadd.f32 %v231, %v312
        %314 = vdwg.mxu0
        %v317 = vrot.slane %v311, 4
        %v318 = vrot.slane %v313, 4
        %v321 = vmax.f32 %v311, %v317
        %v322 = vmax.f32 %v313, %v318
        %v323 = vsel %vm239, %v321, 0.0
        %v324 = vsel %vm239, %v322, 0.0
        %v325 = vadd.f32 %v323, %v324
        %326 = vadd.xlane.f32.xlu0 %v325
        %v327 = vpop.xlane.xlu0 %326
        %v328 = vmul.f32 %v327, 0.00390625
        %v329 = vmul.f32 %v321, %v321
        %v330 = vmul.f32 %v322, %v322
        %v331 = vsel %vm239, %v329, 0.0
        %v332 = vsel %vm239, %v330, 0.0
        %v333 = vadd.f32 %v331, %v332
        %334 = vadd.xlane.f32.xlu0 %v333
        %v335 = vpop.xlane.xlu0 %334
        %v336 = vmul.f32 %v335, 0.00390625
        %v337 = vmul.f32 %v328, %v328
        %v338 = vsub.f32 %v336, %v337
        %v339 = vsub.f32 %v321, %v328
        %v340 = vsub.f32 %v322, %v328
        %v341 = vadd.f32 %v338, 1e-05
        %v342 = vrsqrt.pop %v341
        %v343 = vmul.f32 %v339, %v342
        %v344 = vmul.f32 %v340, %v342
        %346 = vset.pattern.permute.xlu0 0
        %347 = vperm.xlu0 %346, %v225
        %v348 = vpop.permute.xlu0 %347
        %v350 = vmul.f32 %v343, %v348
        %v351 = vmul.f32 %v344, %v348
        %353 = vset.pattern.permute.xlu0 0
        %354 = vperm.xlu0 %353, %v226
        %v355 = vpop.permute.xlu0 %354
        %v357 = vadd.f32 %v350, %v355
        %v358 = vadd.f32 %v351, %v355
        %v361 = vcombine.low %v357, %v358
        %363 = vst [vmem:[%s217] sm:$0xff] %v361
        %s364 = sand.u32 %s137, 1
        %s365 = scalar_lea.sflag [#allocation3], %s364
        %s366 = sand.u32 %s137, 1
        %s367 = smul.addr %s366, 8
        %s368 = scalar_lea.vmem [#allocation2], %s367
        // Predicated region
        $region41: #{tpu_custom_call.1} parent=39 // pred_check
          %p369 = pneg %p147
        $region42: #{tpu_custom_call.1} parent=39 // pred_check_branch
          %371 = sbr.rel (%p369) target = $region44
        $region43: #{tpu_custom_call.1} parent=39 // pred_region
          %s373 = ssub.s32 128, 128
          %374 = vsyncadd %s365, %s373
          %s375 = smul.addr %s19, 2
          %s376 = smul.addr %s375, 64
          %s377 = scalar_lea.hbm %s5, %s376
          %s379 = sshll.u32 %s368, 4
          %s380 = int_to_ptr.vmem [resolvable:$true] %s379
          %382 = dma.vmem_to_hbm [thread:$0]  %s380, 128, %s377, %s365
        $region44: #{tpu_custom_call.1} parent=39 // pred_fallthru
          _
      $region40: #{tpu_custom_call.1} parent=5 // pred_fallthru
        _
      %p383 = scmp.le.s32.totalorder 2, %s14
      // Predicated region
      $region45: #{tpu_custom_call.1} parent=5 // pred_check
        %p384 = pneg %p383
      $region46: #{tpu_custom_call.1} parent=5 // pred_check_branch
        %386 = sbr.rel (%p384) target = $region48
      $region47: #{tpu_custom_call.1} parent=5 // pred_region
        %s387 = ssub.s32 %s14, 2
        // Predicated region
        $region49: #{tpu_custom_call.1} parent=47 // pred_check
          %p388 = pneg %p153
        $region50: #{tpu_custom_call.1} parent=47 // pred_check_branch
          %390 = sbr.rel (%p388) target = $region52
        $region51: #{tpu_custom_call.1} parent=47 // pred_region
          %s391 = sand.u32 %s138, 1
          %s392 = scalar_lea.sflag [#allocation3], %s391
          %s393 = sand.u32 %s138, 1
          %s394 = smul.addr %s393, 8
          %s395 = scalar_lea.vmem [#allocation2], %s394
          %396 = dma.done %s392, 128
        $region52: #{tpu_custom_call.1} parent=47 // pred_fallthru
          _
      $region48: #{tpu_custom_call.1} parent=5 // pred_fallthru
        _
    $region6: #{tpu_custom_call.1} parent=1 // loop_footer
      %s18 = sadd.s32 1, %s14
    $region7: #{tpu_custom_call.1} parent=1 // loop_footer_branch
      %13 = sbr.rel target = $region3
    $region8: #{tpu_custom_call.1} parent=1 // loop_exit
      _
    %397 = vsyncpa [#allocation3], 1
    %s398 = scalar_lea.sflag [#allocation3], 1
    %399 = vsyncpa %s398, 1

</llo_original>
